<compile_context>
chip_gen: v6e
topology: v6e:2x2x1
jax: 0.10.0
libtpu: 0.0.40
codegen_flags: <defaults>
</compile_context>

<pallas_src>
import functools

import jax
import jax.numpy as jnp
from jax import lax
from jax.experimental import pallas as pl
from jax.experimental.pallas import tpu as pltpu


def _fused_conv_pool_relu_kernel(p_ref, w_ref, b_ref, o_ref, *, bn, oh, ow):
    """One grid step == `bn` images.

    p_ref: (bn*OH*OW, K)          bf16 im2col patches (rows n-major, then (oh, ow))
    w_ref: (K, OCp)               bf16 conv weights as a matrix (OC lane-padded to 128)
    b_ref: (1, OCp)               f32 bias (lane-padded)
    o_ref: (bn, OH-1, OW-1, OCp)  f32 pooled + ReLU'd output, lane-dense channel dim
    """
    ocp = w_ref.shape[-1]
    # Conv for all bn images as one lane-dense MXU pass (bf16 inputs, f32 accumulate).
    acc = jnp.dot(p_ref[...], w_ref[...], preferred_element_type=jnp.float32)
    # Epilogue on the accumulator while it is still in VMEM: bias + constant shift.
    v = (acc + b_ref[...] - 0.98).reshape(bn, oh, ow, ocp)
    # 2x2 / stride-1 average pool + ReLU, factored: one sublane-shifted add (ow pairs),
    # then one vreg-aligned add (oh pairs).
    h = v[:, :, :-1, :] + v[:, :, 1:, :]      # (bn, oh, ow-1, ocp)
    s = h[:, :-1, :, :] + h[:, 1:, :, :]      # (bn, oh-1, ow-1, ocp)
    o_ref[...] = jnp.maximum(s * 0.25, 0.0)


def _pick_images_per_step(n, oh, ow, k, ocp, budget_bytes=12 << 20):
    """Largest divisor of n whose double-buffered per-step tiles fit `budget_bytes`
    (safe for v7x's 32 MiB scoped VMEM), capped once the matmul M dim comfortably
    fills every generation's MXU so larger batches keep >=2 'parallel' grid steps."""
    per_img = 2 * (oh * ow * k * 2                       # bf16 patch tile, double-buffered
                   + (oh - 1) * (ow - 1) * ocp * 4)      # f32 output tile, double-buffered
    best = 1
    for bn in range(1, n + 1):
        if n % bn:
            continue
        if bn * per_img > budget_bytes:
            break
        best = bn
        if bn * oh * ow >= 512:
            break
    return best


def model_forward(x, weight, bias, *, stride=2, pad=2):
    """x: (N, C, H, W) f32; weight: (OC, C, KH, KW); bias: (OC,). Returns NCHW f32."""
    N, C, H, W = x.shape
    OC, _, KH, KW = weight.shape
    OH = (H + 2 * pad - KH) // stride + 1
    OW = (W + 2 * pad - KW) // stride + 1
    PH, PW = OH - 1, OW - 1
    K = C * KH * KW

    LANE = 128
    OCp = ((OC + LANE - 1) // LANE) * LANE

    # --- glue: patch extraction as ONE fused XLA op (feature ordering (c, kh, kw)) ---
    patches = lax.conv_general_dilated_patches(
        x, (KH, KW), (stride, stride), [(pad, pad), (pad, pad)])
    # (N, K, OH, OW) -> (N*OH*OW, K), bf16 for the MXU (no K pad: kernel block == full dim).
    patches = patches.transpose(0, 2, 3, 1).reshape(N * OH * OW, K).astype(jnp.bfloat16)

    w_mat = jnp.pad(weight.reshape(OC, K).T,
                    ((0, 0), (0, OCp - OC))).astype(jnp.bfloat16)       # (K, OCp)
    b_mat = jnp.pad(bias, (0, OCp - OC)).reshape(1, OCp).astype(jnp.float32)

    BN = _pick_images_per_step(N, OH, OW, K, OCp)
    kernel = functools.partial(_fused_conv_pool_relu_kernel, bn=BN, oh=OH, ow=OW)

    out_p = pl.pallas_call(
        kernel,
        grid=(N // BN,),
        in_specs=[
            pl.BlockSpec((BN * OH * OW, K), lambda n: (n, 0)),   # this tile's patch rows
            pl.BlockSpec((K, OCp), lambda n: (0, 0)),            # weights (resident)
            pl.BlockSpec((1, OCp), lambda n: (0, 0)),            # bias (resident)
        ],
        out_specs=pl.BlockSpec((BN, PH, PW, OCp), lambda n: (n, 0, 0, 0)),
        out_shape=jax.ShapeDtypeStruct((N, PH, PW, OCp), jnp.float32),
        compiler_params=pltpu.CompilerParams(
            dimension_semantics=("parallel",)),
    )(patches, w_mat, b_mat)

    # glue: drop channel lane-padding, return PyTorch NCHW layout (tiny output tensor).
    return out_p[..., :OC].transpose(0, 3, 1, 2)   # (N, OC, OH-1, OW-1)


def _reference(x, weight, bias, *, stride=2, pad=2):
    v1 = lax.conv_general_dilated(
        x, weight, (stride, stride), [(pad, pad), (pad, pad)],
        dimension_numbers=("NCHW", "OIHW", "NCHW"))
    v2 = v1 + bias[None, :, None, None] - 0.98
    v3 = 0.25 * (v2[:, :, :-1, :-1] + v2[:, :, 1:, :-1]
                 + v2[:, :, :-1, 1:] + v2[:, :, 1:, 1:])
    return jnp.maximum(v3, 0.0)


if __name__ == "__main__":
    key = jax.random.PRNGKey(0)
    kx, kw, kb = jax.random.split(key, 3)

    # Small shapes consistent with the module: N=2, C_in=3, H=W=16, OC=5, 5x5 kernel.
    N, C, H, W = 2, 3, 16, 16
    OC, KH, KW = 5, 5, 5

    x1 = jax.random.normal(kx, (N, C, H, W), dtype=jnp.float32)
    fan_in = C * KH * KW
    bound = 1.0 / (fan_in ** 0.5)
    weight = jax.random.uniform(kw, (OC, C, KH, KW), jnp.float32, -bound, bound)
    bias = jax.random.uniform(kb, (OC,), jnp.float32, -bound, bound)

    out = jax.jit(model_forward)(x1, weight, bias)
    jax.block_until_ready(out)
    assert out.shape == (N, OC, 7, 7), out.shape

    ref = _reference(x1, weight, bias)
    err = float(jnp.max(jnp.abs(out - ref)))
    assert err < 5e-2, f"max abs err {err}"
    print("KERNEL_OK")
</pallas_src>

<mosaic_0001>
module attributes {stable_mosaic.version = 11 : i64} {
  func.func @_fused_conv_pool_relu_kernel(%arg0: i32, %arg1: memref<128x75xbf16, #tpu.memory_space<vmem>>, %arg2: memref<75x128xbf16, #tpu.memory_space<vmem>>, %arg3: memref<1x128xf32, #tpu.memory_space<vmem>>, %arg4: memref<2x7x7x128xf32, #tpu.memory_space<vmem>>) attributes {dimension_semantics = [#tpu.dimension_semantics<parallel>], iteration_bounds = array<i64: 1>, scalar_prefetch = 0 : i64, scratch_operands = 0 : i64, tpu.core_type = #tpu.core_type<tc>, window_params = [{transform_indices = @transform_0, window_bounds = array<i64: 128, 75>}, {pipeline_mode = #tpu.pipeline_mode<synchronous>, transform_indices = @transform_1, window_bounds = array<i64: 75, 128>}, {pipeline_mode = #tpu.pipeline_mode<synchronous>, transform_indices = @transform_2, window_bounds = array<i64: 1, 128>}, {transform_indices = @transform_3, window_bounds = array<i64: 2, 7, 7, 128>}]} {
    %c0 = arith.constant 0 : index
    %c0_0 = arith.constant 0 : index
    %0 = vector.load %arg1[%c0, %c0_0] : memref<128x75xbf16, #tpu.memory_space<vmem>>, vector<128x75xbf16>
    %c0_1 = arith.constant 0 : index
    %c0_2 = arith.constant 0 : index
    %1 = vector.load %arg2[%c0_1, %c0_2] : memref<75x128xbf16, #tpu.memory_space<vmem>>, vector<75x128xbf16>
    %cst = arith.constant dense<0.000000e+00> : vector<128x128xf32>
    %2 = tpu.matmul %0, %1, %cst {dimension_numbers = #tpu.dot_dimension_numbers<[1], [0], [0], [1], [0, 0, 1, 1], [], []>} : vector<128x75xbf16>, vector<75x128xbf16>, vector<128x128xf32> -> vector<128x128xf32>
    %c0_3 = arith.constant 0 : index
    %c0_4 = arith.constant 0 : index
    %3 = vector.load %arg3[%c0_3, %c0_4] : memref<1x128xf32, #tpu.memory_space<vmem>>, vector<1x128xf32>
    %4 = vector.broadcast %3 : vector<1x128xf32> to vector<128x128xf32>
    %5 = arith.addf %2, %4 : vector<128x128xf32>
    %cst_5 = arith.constant 9.800000e-01 : f32
    %6 = vector.broadcast %cst_5 : f32 to vector<128x128xf32>
    %7 = arith.subf %5, %6 : vector<128x128xf32>
    %8 = vector.shape_cast %7 : vector<128x128xf32> to vector<2x8x8x128xf32>
    %9 = vector.extract_strided_slice %8 {offsets = [0, 0, 0, 0], sizes = [2, 8, 7, 128], strides = [1, 1, 1, 1]} : vector<2x8x8x128xf32> to vector<2x8x7x128xf32>
    %10 = vector.extract_strided_slice %8 {offsets = [0, 0, 1, 0], sizes = [2, 8, 7, 128], strides = [1, 1, 1, 1]} : vector<2x8x8x128xf32> to vector<2x8x7x128xf32>
    %11 = arith.addf %9, %10 : vector<2x8x7x128xf32>
    %12 = vector.extract_strided_slice %11 {offsets = [0, 0, 0, 0], sizes = [2, 7, 7, 128], strides = [1, 1, 1, 1]} : vector<2x8x7x128xf32> to vector<2x7x7x128xf32>
    %13 = vector.extract_strided_slice %11 {offsets = [0, 1, 0, 0], sizes = [2, 7, 7, 128], strides = [1, 1, 1, 1]} : vector<2x8x7x128xf32> to vector<2x7x7x128xf32>
    %14 = arith.addf %12, %13 : vector<2x7x7x128xf32>
    %cst_6 = arith.constant 2.500000e-01 : f32
    %15 = vector.broadcast %cst_6 : f32 to vector<2x7x7x128xf32>
    %16 = arith.mulf %14, %15 : vector<2x7x7x128xf32>
    %cst_7 = arith.constant 0.000000e+00 : f32
    %17 = vector.broadcast %cst_7 : f32 to vector<2x7x7x128xf32>
    %18 = arith.maximumf %16, %17 : vector<2x7x7x128xf32>
    %c0_8 = arith.constant 0 : index
    %c0_9 = arith.constant 0 : index
    %c0_10 = arith.constant 0 : index
    %c0_11 = arith.constant 0 : index
    %19 = vector.load %arg4[%c0_8, %c0_9, %c0_10, %c0_11] : memref<2x7x7x128xf32, #tpu.memory_space<vmem>>, vector<2x7x7x128xf32>
    tpu.vector_store %arg4[%c0_8, %c0_9, %c0_10, %c0_11], %18 {strides = array<i32>} : memref<2x7x7x128xf32, #tpu.memory_space<vmem>>, vector<2x7x7x128xf32>,
    return
  }
  func.func @transform_0(%arg0: i32) -> (i32, i32) {
    %c0_i32 = arith.constant 0 : i32
    %c0_i32_0 = arith.constant 0 : i32
    return %arg0, %c0_i32 : i32, i32
  }
  func.func @transform_1(%arg0: i32) -> (i32, i32) {
    %c0_i32 = arith.constant 0 : i32
    %c0_i32_0 = arith.constant 0 : i32
    %c0_i32_1 = arith.constant 0 : i32
    return %c0_i32, %c0_i32_0 : i32, i32
  }
  func.func @transform_2(%arg0: i32) -> (i32, i32) {
    %c0_i32 = arith.constant 0 : i32
    %c0_i32_0 = arith.constant 0 : i32
    %c0_i32_1 = arith.constant 0 : i32
    return %c0_i32, %c0_i32_0 : i32, i32
  }
  func.func @transform_3(%arg0: i32) -> (i32, i32, i32, i32) {
    %c0_i32 = arith.constant 0 : i32
    %c0_i32_0 = arith.constant 0 : i32
    %c0_i32_1 = arith.constant 0 : i32
    %c0_i32_2 = arith.constant 0 : i32
    return %arg0, %c0_i32, %c0_i32_0, %c0_i32_1 : i32, i32, i32, i32
  }
}

</mosaic_0001>

<llo_original>
// kernel: model_forward.1
$region0: #{model_forward.1}
  #allocation0 [shape = 'u32[]', space=smem, size = 0x4, offset = 0x4, fixed_abs, tag = 'smem constant byte address 0x4 - core index']
  #allocation1 [shape = 'u32[144,128]{1,0:T(1,128)}', space=vmem, size = 0x12000, scoped, tag = 'internal scratch']
  %s0 = inlined_call_operand.vmem [shape: bf16[128,75], index: 0, kind: input, shape index: {}]
  %s1 = inlined_call_operand.vmem [shape: bf16[75,128], index: 1, kind: input, shape index: {}]
  %s2 = inlined_call_operand.vmem [shape: f32[1,128], index: 2, kind: input, shape index: {}]
  %s3 = inlined_call_operand.vmem [shape: f32[2,7,7,128], index: 3, kind: output, shape index: {}]
  %s4 = sld [smem:[#allocation0]]
  $region22: #{model_forward.1} parent=0
    _
  %s6 = ssub.s32 1, %s4
  %s7 = scalar_select 0, %s6, %s4
  // Predicated region
  $region2: #{model_forward.1} parent=0 // pred_check
    _
  $region3: #{model_forward.1} parent=0 // pred_check_branch
    %9 = sbr.rel (0) target = $region5
  $region4: #{model_forward.1} parent=0 // pred_region
    _
  $region5: #{model_forward.1} parent=0 // pred_fallthru
    _
  // Predicated region
  $region6: #{model_forward.1} parent=0 // pred_check
    _
  $region7: #{model_forward.1} parent=0 // pred_check_branch
    %11 = sbr.rel (0) target = $region9
  $region8: #{model_forward.1} parent=0 // pred_region
    _
  $region9: #{model_forward.1} parent=0 // pred_fallthru
    _
  // Predicated region
  $region10: #{model_forward.1} parent=0 // pred_check
    _
  $region11: #{model_forward.1} parent=0 // pred_check_branch
    %13 = sbr.rel (0) target = $region13
  $region12: #{model_forward.1} parent=0 // pred_region
    _
  $region13: #{model_forward.1} parent=0 // pred_fallthru
    _
  %v15 = vld [vmem:[%s0] sm:$0xf]
  %v16 = vld [vmem:[%s0 + $0x4] sm:$0xf]
  %v17 = vld [vmem:[%s0 + $0x8] sm:$0xf]
  %v18 = vld [vmem:[%s0 + $0xc] sm:$0xf]
  %v19 = vld [vmem:[%s0 + $0x10] sm:$0xf]
  %v20 = vld [vmem:[%s0 + $0x14] sm:$0xf]
  %v21 = vld [vmem:[%s0 + $0x18] sm:$0xf]
  %v22 = vld [vmem:[%s0 + $0x1c] sm:$0xf]
  %v23 = vld [vmem:[%s0 + $0x20] sm:$0xf]
  %v24 = vld [vmem:[%s0 + $0x24] sm:$0xf]
  %v25 = vld [vmem:[%s0 + $0x28] sm:$0xf]
  %v26 = vld [vmem:[%s0 + $0x2c] sm:$0xf]
  %v27 = vld [vmem:[%s0 + $0x30] sm:$0xf]
  %v28 = vld [vmem:[%s0 + $0x34] sm:$0xf]
  %v29 = vld [vmem:[%s0 + $0x38] sm:$0xf]
  %v30 = vld [vmem:[%s0 + $0x3c] sm:$0xf]
  %v31 = vld [vmem:[%s1] sm:$0xf]
  %v32 = vld [vmem:[%s1 + $0x4] sm:$0xf]
  %v33 = vld [vmem:[%s1 + $0x8] sm:$0xf]
  %v34 = vld [vmem:[%s1 + $0xc] sm:$0xf]
  %v35 = vld [vmem:[%s1 + $0x10] sm:$0xf]
  %v36 = vld [vmem:[%s1 + $0x14] sm:$0xf]
  %v37 = vld [vmem:[%s1 + $0x18] sm:$0xf]
  %v38 = vld [vmem:[%s1 + $0x1c] sm:$0xf]
  %v39 = vld [vmem:[%s1 + $0x20] sm:$0xf]
  %v40 = vld [vmem:[%s1 + $0x24] sm:$0x3]
  %v41 = vld [vmem:[%s2] sm:$0x1]
  %v43 = vlaneseq
  %v44 = vshrl.u32 %v43, 7
  %v45 = vsub.s32 0, %v44
  %v46 = vrot.slane %v41, %v45
  %v64 = vunpack.c.l.b16 %v15
  %v65 = vunpack.c.l.b16 %v16
  %v66 = vunpack.c.l.b16 %v17
  %v67 = vunpack.c.l.b16 %v18
  %v68 = vunpack.c.l.b16 %v19
  %v69 = vunpack.c.l.b16 %v20
  %v70 = vunpack.c.l.b16 %v21
  %v71 = vunpack.c.l.b16 %v22
  %v72 = vunpack.c.l.b16 %v23
  %v73 = vunpack.c.l.b16 %v24
  %v74 = vunpack.c.l.b16 %v25
  %v75 = vunpack.c.l.b16 %v26
  %v76 = vunpack.c.l.b16 %v27
  %v77 = vunpack.c.l.b16 %v28
  %v78 = vunpack.c.l.b16 %v29
  %v79 = vunpack.c.l.b16 %v30
  %v80 = vpack.c.b16 %v65, %v64
  %v81 = vpack.c.b16 %v67, %v66
  %v82 = vpack.c.b16 %v69, %v68
  %v83 = vpack.c.b16 %v71, %v70
  %v84 = vpack.c.b16 %v73, %v72
  %v85 = vpack.c.b16 %v75, %v74
  %v86 = vpack.c.b16 %v77, %v76
  %v87 = vpack.c.b16 %v79, %v78
  %v98 = vunpack.c.l.b16 %v31
  %v99 = vunpack.c.l.b16 %v32
  %v100 = vunpack.c.l.b16 %v33
  %v101 = vunpack.c.l.b16 %v34
  %v102 = vunpack.c.l.b16 %v35
  %v103 = vunpack.c.l.b16 %v36
  %v104 = vunpack.c.l.b16 %v37
  %v105 = vunpack.c.l.b16 %v38
  %v106 = vunpack.c.l.b16 %v39
  %v107 = vunpack.c.l.b16 %v40
  %v108 = vpack.c.b16 %v99, %v98
  %v109 = vpack.c.b16 %v101, %v100
  %v110 = vpack.c.b16 %v103, %v102
  %v111 = vpack.c.b16 %v105, %v104
  %v112 = vpack.c.b16 %v107, %v106
  %vm117 = vcmask 613376
  %v119 = vsel %vm117, %v80, 0
  %v122 = vsel %vm117, %v81, 0
  %v125 = vsel %vm117, %v82, 0
  %v128 = vsel %vm117, %v83, 0
  %v131 = vsel %vm117, %v84, 0
  %v134 = vsel %vm117, %v85, 0
  %v137 = vsel %vm117, %v86, 0
  %v140 = vsel %vm117, %v87, 0
  %vm142 = vcmask 1044480
  %vm143 = vcmask 1045504
  %v144 = vsel %vm142, 4294967295, 65535
  %v145 = vsel %vm143, %v144, 0
  %v147 = vand.u32 %v112, %v145
  %149 = vmatprep.subr.bf16.mxu0 0
  %150 = vmatpush1.bf16.msra.mxu0 0
  %151 = vmatprep.subr.bf16.mxu0 0
  %152 = vmatpush1.bf16.msra.mxu0 0
  %153 = vmatprep.subr.bf16.mxu0 0
  %154 = vmatpush1.bf16.msra.mxu0 0
  %155 = vmatprep.subr.bf16.mxu0 0
  %156 = vmatpush1.bf16.msra.mxu0 %v147
  %157 = vmatprep.subr.bf16.mxu0 0
  %158 = vmatpush1.bf16.msra.mxu0 %v111
  %159 = vmatprep.subr.bf16.mxu0 0
  %160 = vmatpush1.bf16.msra.mxu0 %v110
  %161 = vmatprep.subr.bf16.mxu0 0
  %162 = vmatpush1.bf16.msra.mxu0 %v109
  %163 = vmatprep.subr.bf16.mxu0 0
  %164 = vmatpush1.bf16.msra.mxu0 %v108
  %165 = vmatprep.subr.bf16.mxu0 0
  %166 = vmatpush2.bf16.msra.mxu0 0
  %167 = vmatprep.subr.bf16.mxu0 0
  %168 = vmatpush2.bf16.msra.mxu0 0
  %169 = vmatprep.subr.bf16.mxu0 0
  %170 = vmatpush2.bf16.msra.mxu0 0
  %171 = vmatprep.subr.bf16.mxu0 0
  %172 = vmatpush2.bf16.msra.mxu0 0
  %173 = vmatprep.subr.bf16.mxu0 0
  %174 = vmatpush2.bf16.msra.mxu0 0
  %175 = vmatprep.subr.bf16.mxu0 0
  %176 = vmatpush2.bf16.msra.mxu0 0
  %177 = vmatprep.subr.bf16.mxu0 0
  %178 = vmatpush2.bf16.msra.mxu0 0
  %179 = vmatprep.subr.bf16.mxu0 0
  %180 = vmatpush2.bf16.msra.mxu0 0
  %181 = vmatprep.mubr.bf16.mxu0 0
  %182 = vmatmul.mubr.bf16.gmra.mxu0 %v119
  %v183 = vpop.f32.mrf.mxu0
  %v184 = vadd.f32 %v46, %v183
  %v185 = vpop.f32.mrf.mxu0
  %v186 = vpop.f32.mrf.mxu0
  %v187 = vadd.f32 %v46, %v186
  %v188 = vpop.f32.mrf.mxu0
  %189 = vmatprep.mubr.bf16.mxu0 0
  %190 = vmatmul.mubr.bf16.gmra.mxu0 %v122
  %v191 = vpop.f32.mrf.mxu0
  %v192 = vadd.f32 %v46, %v191
  %v193 = vpop.f32.mrf.mxu0
  %v194 = vpop.f32.mrf.mxu0
  %v195 = vadd.f32 %v46, %v194
  %v196 = vpop.f32.mrf.mxu0
  %197 = vmatprep.mubr.bf16.mxu0 0
  %198 = vmatmul.mubr.bf16.gmra.mxu0 %v125
  %v199 = vpop.f32.mrf.mxu0
  %v200 = vadd.f32 %v46, %v199
  %v201 = vpop.f32.mrf.mxu0
  %v202 = vpop.f32.mrf.mxu0
  %v203 = vadd.f32 %v46, %v202
  %v204 = vpop.f32.mrf.mxu0
  %205 = vmatprep.mubr.bf16.mxu0 0
  %206 = vmatmul.mubr.bf16.gmra.mxu0 %v128
  %v207 = vpop.f32.mrf.mxu0
  %v208 = vadd.f32 %v46, %v207
  %v209 = vpop.f32.mrf.mxu0
  %v210 = vpop.f32.mrf.mxu0
  %v211 = vadd.f32 %v46, %v210
  %v212 = vpop.f32.mrf.mxu0
  %213 = vmatprep.mubr.bf16.mxu0 0
  %214 = vmatmul.mubr.bf16.gmra.mxu0 %v131
  %v215 = vpop.f32.mrf.mxu0
  %v216 = vadd.f32 %v46, %v215
  %v217 = vpop.f32.mrf.mxu0
  %v218 = vpop.f32.mrf.mxu0
  %v219 = vadd.f32 %v46, %v218
  %v220 = vpop.f32.mrf.mxu0
  %221 = vmatprep.mubr.bf16.mxu0 0
  %222 = vmatmul.mubr.bf16.gmra.mxu0 %v134
  %v223 = vpop.f32.mrf.mxu0
  %v224 = vadd.f32 %v46, %v223
  %v225 = vpop.f32.mrf.mxu0
  %v226 = vpop.f32.mrf.mxu0
  %v227 = vadd.f32 %v46, %v226
  %v228 = vpop.f32.mrf.mxu0
  %229 = vmatprep.mubr.bf16.mxu0 0
  %230 = vmatmul.mubr.bf16.gmra.mxu0 %v137
  %v231 = vpop.f32.mrf.mxu0
  %v232 = vadd.f32 %v46, %v231
  %v233 = vpop.f32.mrf.mxu0
  %v234 = vpop.f32.mrf.mxu0
  %v235 = vadd.f32 %v46, %v234
  %v236 = vpop.f32.mrf.mxu0
  %237 = vmatprep.mubr.bf16.mxu0 0
  %238 = vmatmul.mubr.bf16.gmra.mxu0 %v140
  %v239 = vpop.f32.mrf.mxu0
  %v240 = vadd.f32 %v46, %v239
  %v241 = vpop.f32.mrf.mxu0
  %v242 = vpop.f32.mrf.mxu0
  %v243 = vadd.f32 %v46, %v242
  %v244 = vpop.f32.mrf.mxu0
  %245 = vdwg.mxu0
  %v246 = vsub.f32 %v184, 0.98
  %v247 = vsub.f32 %v187, 0.98
  %v248 = vsub.f32 %v192, 0.98
  %v249 = vsub.f32 %v195, 0.98
  %v250 = vsub.f32 %v200, 0.98
  %v251 = vsub.f32 %v203, 0.98
  %v252 = vsub.f32 %v208, 0.98
  %v253 = vsub.f32 %v211, 0.98
  %v254 = vsub.f32 %v216, 0.98
  %v255 = vsub.f32 %v219, 0.98
  %v256 = vsub.f32 %v224, 0.98
  %v257 = vsub.f32 %v227, 0.98
  %v258 = vsub.f32 %v232, 0.98
  %v259 = vsub.f32 %v235, 0.98
  %v260 = vsub.f32 %v240, 0.98
  %v261 = vsub.f32 %v243, 0.98
  %v278 = vrot.slane %v246, 1
  %v279 = vrot.slane %v247, 1
  %v280 = vrot.slane %v248, 1
  %v281 = vrot.slane %v249, 1
  %v282 = vrot.slane %v250, 1
  %v283 = vrot.slane %v251, 1
  %v284 = vrot.slane %v252, 1
  %v285 = vrot.slane %v253, 1
  %v286 = vrot.slane %v254, 1
  %v287 = vrot.slane %v255, 1
  %v288 = vrot.slane %v256, 1
  %v289 = vrot.slane %v257, 1
  %v290 = vrot.slane %v258, 1
  %v291 = vrot.slane %v259, 1
  %v292 = vrot.slane %v260, 1
  %v293 = vrot.slane %v261, 1
  %v310 = vadd.f32 %v246, %v278
  %v311 = vadd.f32 %v247, %v279
  %v312 = vadd.f32 %v248, %v280
  %v313 = vadd.f32 %v249, %v281
  %v314 = vadd.f32 %v250, %v282
  %v315 = vadd.f32 %v251, %v283
  %v316 = vadd.f32 %v252, %v284
  %v317 = vadd.f32 %v253, %v285
  %v318 = vadd.f32 %v254, %v286
  %v319 = vadd.f32 %v255, %v287
  %v320 = vadd.f32 %v256, %v288
  %v321 = vadd.f32 %v257, %v289
  %v322 = vadd.f32 %v258, %v290
  %v323 = vadd.f32 %v259, %v291
  %v324 = vadd.f32 %v260, %v292
  %v325 = vadd.f32 %v261, %v293
  %v326 = vadd.f32 %v310, %v311
  %v327 = vadd.f32 %v311, %v312
  %v328 = vadd.f32 %v312, %v313
  %v329 = vadd.f32 %v313, %v314
  %v330 = vadd.f32 %v314, %v315
  %v331 = vadd.f32 %v315, %v316
  %v332 = vadd.f32 %v316, %v317
  %v333 = vadd.f32 %v318, %v319
  %v334 = vadd.f32 %v319, %v320
  %v335 = vadd.f32 %v320, %v321
  %v336 = vadd.f32 %v321, %v322
  %v337 = vadd.f32 %v322, %v323
  %v338 = vadd.f32 %v323, %v324
  %v339 = vadd.f32 %v324, %v325
  %v340 = vmul.f32 %v326, 0.25
  %v341 = vmul.f32 %v327, 0.25
  %v342 = vmul.f32 %v328, 0.25
  %v343 = vmul.f32 %v329, 0.25
  %v344 = vmul.f32 %v330, 0.25
  %v345 = vmul.f32 %v331, 0.25
  %v346 = vmul.f32 %v332, 0.25
  %v347 = vmul.f32 %v333, 0.25
  %v348 = vmul.f32 %v334, 0.25
  %v349 = vmul.f32 %v335, 0.25
  %v350 = vmul.f32 %v336, 0.25
  %v351 = vmul.f32 %v337, 0.25
  %v352 = vmul.f32 %v338, 0.25
  %v353 = vmul.f32 %v339, 0.25
  %v354 = vmax.f32 %v340, 0.0
  %v355 = vmax.f32 %v341, 0.0
  %v356 = vmax.f32 %v342, 0.0
  %v357 = vmax.f32 %v343, 0.0
  %v358 = vmax.f32 %v344, 0.0
  %v359 = vmax.f32 %v345, 0.0
  %v360 = vmax.f32 %v346, 0.0
  %v361 = vmax.f32 %v347, 0.0
  %v362 = vmax.f32 %v348, 0.0
  %v363 = vmax.f32 %v349, 0.0
  %v364 = vmax.f32 %v350, 0.0
  %v365 = vmax.f32 %v351, 0.0
  %v366 = vmax.f32 %v352, 0.0
  %v367 = vmax.f32 %v353, 0.0
  %368 = vst [vmem:[%s3] sm:$0x7f] %v354
  %369 = vst [vmem:[%s3 + $0x8] sm:$0x7f] %v355
  %370 = vst [vmem:[%s3 + $0x10] sm:$0x7f] %v356
  %371 = vst [vmem:[%s3 + $0x18] sm:$0x7f] %v357
  %372 = vst [vmem:[%s3 + $0x20] sm:$0x7f] %v358
  %373 = vst [vmem:[%s3 + $0x28] sm:$0x7f] %v359
  %374 = vst [vmem:[%s3 + $0x30] sm:$0x7f] %v360
  %375 = vst [vmem:[%s3 + $0x38] sm:$0x7f] %v361
  %376 = vst [vmem:[%s3 + $0x40] sm:$0x7f] %v362
  %377 = vst [vmem:[%s3 + $0x48] sm:$0x7f] %v363
  %378 = vst [vmem:[%s3 + $0x50] sm:$0x7f] %v364
  %379 = vst [vmem:[%s3 + $0x58] sm:$0x7f] %v365
  %380 = vst [vmem:[%s3 + $0x60] sm:$0x7f] %v366
  %381 = vst [vmem:[%s3 + $0x68] sm:$0x7f] %v367
  // Predicated region
  $region14: #{model_forward.1} parent=0 // pred_check
    _
  $region15: #{model_forward.1} parent=0 // pred_check_branch
    %383 = sbr.rel (0) target = $region17
  $region16: #{model_forward.1} parent=0 // pred_region
    _
  $region17: #{model_forward.1} parent=0 // pred_fallthru
    _
  // Predicated region
  $region18: #{model_forward.1} parent=0 // pred_check
    _
  $region19: #{model_forward.1} parent=0 // pred_check_branch
    %385 = sbr.rel (0) target = $region21
  $region20: #{model_forward.1} parent=0 // pred_region
    _
  $region21: #{model_forward.1} parent=0 // pred_fallthru
    _

</llo_original>
